<compile_context>
chip_gen: v7x
topology: tpu7x:2x2x1
jax: 0.10.0
libtpu: 0.0.40
codegen_flags: <defaults>
</compile_context>

<pallas_src>
import jax
import jax.numpy as jnp
from jax.experimental import pallas as pl
from jax.experimental.pallas import tpu as pltpu


# =============================================================================
# Kernel 1: Embed  --  y = x @ W + b ;  y / ||y||_2 per row
# =============================================================================
def _embed_kernel(x_ref, w_ref, b_ref, o_ref):
    x = x_ref[...].astype(jnp.float32)
    w = w_ref[...].astype(jnp.float32)
    b = b_ref[...].astype(jnp.float32)            # (1, feat_dim)
    y = jnp.dot(x, w, preferred_element_type=jnp.float32,
                precision=jax.lax.Precision.HIGHEST) + b
    norm = jnp.sqrt(jnp.sum(y * y, axis=1, keepdims=True))
    o_ref[...] = y / jnp.maximum(norm, 1e-12)


def embed(x, w, b, *, tile_b=None):
    """Embed module: linear projection + L2 row-normalisation."""
    bs, in_dim = x.shape
    _, feat_dim = w.shape
    tile_b = bs if tile_b is None else tile_b
    assert bs % tile_b == 0
    return pl.pallas_call(
        _embed_kernel,
        out_shape=jax.ShapeDtypeStruct((bs, feat_dim), jnp.float32),
        grid=(bs // tile_b,),
        in_specs=[
            pl.BlockSpec((tile_b, in_dim), lambda i: (i, 0)),
            pl.BlockSpec((in_dim, feat_dim), lambda i: (0, 0)),
            pl.BlockSpec((1, feat_dim), lambda i: (0, 0)),
        ],
        out_specs=pl.BlockSpec((tile_b, feat_dim), lambda i: (i, 0)),
        compiler_params=pltpu.CompilerParams(dimension_semantics=("parallel",)),
    )(x, w, b.reshape(1, feat_dim))


# =============================================================================
# Kernel 2: ContrastMemory scores  --  exp(<memory rows, embedding> / T), both sides
# =============================================================================
def _make_contrast_kernel(nce_t):
    inv_t = 1.0 / float(nce_t)

    def kernel(ws_ref, wt_ref, es_ref, et_ref, ot_ref, os_ref):
        w_s = ws_ref[...].astype(jnp.float32)                    # (tb, K+1, D)  memory_s rows
        w_t = wt_ref[...].astype(jnp.float32)                    # (tb, K+1, D)  memory_t rows
        e_s = es_ref[...].astype(jnp.float32)[:, None, :]        # (tb, 1, D)
        e_t = et_ref[...].astype(jnp.float32)[:, None, :]
        # Batched <memory row, embedding> as multiply + lane-reduce (D tiny; MXU not needed).
        ot_ref[...] = jnp.exp(jnp.sum(w_s * e_t, axis=-1) * inv_t)   # teacher anchored by memory_s
        os_ref[...] = jnp.exp(jnp.sum(w_t * e_s, axis=-1) * inv_t)   # student anchored by memory_t

    return kernel


def contrast_exp(w_s, w_t, emb_s, emb_t, nce_t, *, tile_b=None):
    bs, k1, d = w_s.shape
    tile_b = bs if tile_b is None else tile_b
    assert bs % tile_b == 0
    return pl.pallas_call(
        _make_contrast_kernel(nce_t),
        out_shape=(jax.ShapeDtypeStruct((bs, k1), jnp.float32),
                   jax.ShapeDtypeStruct((bs, k1), jnp.float32)),
        grid=(bs // tile_b,),
        in_specs=[
            pl.BlockSpec((tile_b, k1, d), lambda i: (i, 0, 0)),
            pl.BlockSpec((tile_b, k1, d), lambda i: (i, 0, 0)),
            pl.BlockSpec((tile_b, d), lambda i: (i, 0)),
            pl.BlockSpec((tile_b, d), lambda i: (i, 0)),
        ],
        out_specs=(pl.BlockSpec((tile_b, k1), lambda i: (i, 0)),
                   pl.BlockSpec((tile_b, k1), lambda i: (i, 0))),
        compiler_params=pltpu.CompilerParams(dimension_semantics=("parallel",)),
    )(w_s, w_t, emb_s, emb_t)


# =============================================================================
# Kernel 3: ContrastLoss (both sides, fused) -- scalar NCE loss accumulated over batch tiles
# =============================================================================
def _make_nce_loss_kernel(nce_n, n_data, batch, eps=1e-7):
    noise = float(nce_n) / float(n_data)          # m * Pn
    inv_b = 1.0 / float(batch)

    def kernel(z_ref, os_ref, ot_ref, loss_ref):
        i = pl.program_id(0)

        @pl.when(i == 0)
        def _():
            loss_ref[...] = jnp.zeros_like(loss_ref)

        out_s = os_ref[...] * (1.0 / z_ref[0])    # normalize by Z_s
        out_t = ot_ref[...] * (1.0 / z_ref[1])    # normalize by Z_t

        col = jax.lax.broadcasted_iota(jnp.int32, out_s.shape, 1)
        is_pos = col == 0                          # column 0 is the positive pair

        def side_sum(out):
            num = jnp.where(is_pos, out, noise)    # pos: P/(P+mPn) ; neg: mPn/(P+mPn)
            return jnp.sum(jnp.log(num / (out + (noise + eps))))

        loss_ref[0, 0] += -(side_sum(out_s) + side_sum(out_t)) * inv_b

    return kernel


def nce_loss(z, out_exp_s, out_exp_t, nce_n, n_data, *, tile_b=None):
    bs, k1 = out_exp_s.shape
    tile_b = bs if tile_b is None else tile_b
    assert bs % tile_b == 0
    loss = pl.pallas_call(
        _make_nce_loss_kernel(nce_n, n_data, bs),
        out_shape=jax.ShapeDtypeStruct((1, 1), jnp.float32),
        grid=(bs // tile_b,),
        in_specs=[
            pl.BlockSpec(memory_space=pltpu.MemorySpace.SMEM),   # (2,) = [Z_s, Z_t]
            pl.BlockSpec((tile_b, k1), lambda i: (i, 0)),
            pl.BlockSpec((tile_b, k1), lambda i: (i, 0)),
        ],
        out_specs=pl.BlockSpec((1, 1), lambda i: (0, 0)),
        compiler_params=pltpu.CompilerParams(dimension_semantics=("arbitrary",)),
    )(z, out_exp_s, out_exp_t)
    return loss[0, 0]


# =============================================================================
# CRD forward (functional)
# =============================================================================
def crd_forward(feat_s, feat_t, idx, sample_idx, params, *, nce_t, nce_mom, n_data):
    """Returns (loss, (new_memory_s, new_memory_t, z_s, z_t))."""
    w_lin_s, b_lin_s, w_lin_t, b_lin_t, memory_s, memory_t = params
    bs = feat_s.shape[0]
    k1 = sample_idx.shape[1]
    d = memory_s.shape[1]

    emb_s = embed(feat_s.reshape(bs, -1), w_lin_s, b_lin_s)
    emb_t = embed(feat_t.reshape(bs, -1), w_lin_t, b_lin_t)

    # TODO(synk): the (bs, K+1) memory-row gather stays as an XLA gather (jnp.take); an
    # in-kernel Element/scalar-prefetch gather would force one tiny row per grid step.
    flat = sample_idx.reshape(-1)
    w_s = jnp.take(memory_s, flat, axis=0).reshape(bs, k1, d)
    w_t = jnp.take(memory_t, flat, axis=0).reshape(bs, k1, d)

    out_exp_t, out_exp_s = contrast_exp(w_s, w_t, emb_s, emb_t, nce_t)

    # Z constants: first-call behaviour of ContrastMemory (params buffer == -1).
    z_s = jnp.mean(out_exp_s) * n_data
    z_t = jnp.mean(out_exp_t) * n_data
    z = jnp.stack([z_s, z_t]).astype(jnp.float32)

    loss = nce_loss(z, out_exp_s, out_exp_t, k1 - 1, n_data)

    # TODO(synk): the memory-bank momentum update + Z caching are in-place torch buffer
    # writes; returned functionally here via a plain-JAX scatter (does not affect loss).
    def _update(mem, emb_new):
        upd = mem[idx] * nce_mom + emb_new * (1.0 - nce_mom)
        upd = upd / jnp.sqrt(jnp.sum(upd * upd, axis=1, keepdims=True))
        return mem.at[idx].set(upd)

    return loss, (_update(memory_s, emb_s), _update(memory_t, emb_t), z_s, z_t)


# =============================================================================
# Pure-JAX reference (mirror of the torch module)
# =============================================================================
def _reference(feat_s, feat_t, idx, sample_idx, params, *, nce_t, n_data, eps=1e-7):
    w_lin_s, b_lin_s, w_lin_t, b_lin_t, memory_s, memory_t = params
    bs = feat_s.shape[0]
    k1 = sample_idx.shape[1]
    d = memory_s.shape[1]

    def emb(x, w, b):
        y = jnp.dot(x.reshape(bs, -1), w, precision=jax.lax.Precision.HIGHEST) + b
        return y / jnp.maximum(jnp.sqrt(jnp.sum(y * y, axis=1, keepdims=True)), 1e-12)

    e_s = emb(feat_s, w_lin_s, b_lin_s)
    e_t = emb(feat_t, w_lin_t, b_lin_t)

    flat = sample_idx.reshape(-1)
    w_s = memory_s[flat].reshape(bs, k1, d)
    w_t = memory_t[flat].reshape(bs, k1, d)

    out_t = jnp.exp(jnp.sum(w_s * e_t[:, None, :], axis=-1) / nce_t)
    out_s = jnp.exp(jnp.sum(w_t * e_s[:, None, :], axis=-1) / nce_t)
    out_t = out_t / (jnp.mean(out_t) * n_data)
    out_s = out_s / (jnp.mean(out_s) * n_data)

    m = k1 - 1
    pn = 1.0 / n_data

    def contrast_loss(x):
        pos, neg = x[:, 0], x[:, 1:]
        log_d1 = jnp.log(pos / (pos + m * pn + eps))
        log_d0 = jnp.log((m * pn) / (neg + m * pn + eps))
        return -(jnp.sum(log_d1) + jnp.sum(log_d0)) / bs

    return contrast_loss(out_s) + contrast_loss(out_t)


if __name__ == "__main__":
    key = jax.random.PRNGKey(0)
    ks = jax.random.split(key, 9)

    BS, S_DIM, T_DIM, FEAT_DIM = 8, 32, 48, 16
    NCE_N, NCE_T, NCE_MOM, N_DATA = 15, 0.07, 0.5, 64

    feat_s = jax.random.normal(ks[0], (BS, S_DIM), jnp.float32)
    feat_t = jax.random.normal(ks[1], (BS, T_DIM), jnp.float32)

    w_lin_s = jax.random.normal(ks[2], (S_DIM, FEAT_DIM), jnp.float32) / jnp.sqrt(S_DIM)
    b_lin_s = 0.01 * jax.random.normal(ks[3], (FEAT_DIM,), jnp.float32)
    w_lin_t = jax.random.normal(ks[4], (T_DIM, FEAT_DIM), jnp.float32) / jnp.sqrt(T_DIM)
    b_lin_t = 0.01 * jax.random.normal(ks[5], (FEAT_DIM,), jnp.float32)

    stdv = 1.0 / (FEAT_DIM / 3.0) ** 0.5
    memory_s = jax.random.uniform(ks[6], (N_DATA, FEAT_DIM), jnp.float32, -stdv, stdv)
    memory_t = jax.random.uniform(ks[7], (N_DATA, FEAT_DIM), jnp.float32, -stdv, stdv)

    idx = jnp.arange(BS, dtype=jnp.int32)
    negatives = jax.random.randint(ks[8], (BS, NCE_N), 0, N_DATA, dtype=jnp.int32)
    sample_idx = jnp.concatenate([idx[:, None], negatives], axis=1)   # col 0 = positive

    params = (w_lin_s, b_lin_s, w_lin_t, b_lin_t, memory_s, memory_t)

    loss, (new_mem_s, new_mem_t, z_s, z_t) = crd_forward(
        feat_s, feat_t, idx, sample_idx, params,
        nce_t=NCE_T, nce_mom=NCE_MOM, n_data=N_DATA)
    loss = jax.block_until_ready(loss)

    ref = _reference(feat_s, feat_t, idx, sample_idx, params, nce_t=NCE_T, n_data=N_DATA)
    assert jnp.allclose(loss, ref, rtol=1e-3, atol=1e-3), (loss, ref)

    print("KERNEL_OK")
</pallas_src>

<mosaic_0001>
module attributes {stable_mosaic.version = 11 : i64} {
  func.func @_embed_kernel(%arg0: i32, %arg1: memref<8x32xf32, #tpu.memory_space<vmem>>, %arg2: memref<32x16xf32, #tpu.memory_space<vmem>>, %arg3: memref<1x16xf32, #tpu.memory_space<vmem>>, %arg4: memref<8x16xf32, #tpu.memory_space<vmem>>) attributes {dimension_semantics = [#tpu.dimension_semantics<parallel>], iteration_bounds = array<i64: 1>, scalar_prefetch = 0 : i64, scratch_operands = 0 : i64, tpu.core_type = #tpu.core_type<tc>, window_params = [{transform_indices = @transform_0, window_bounds = array<i64: 8, 32>}, {pipeline_mode = #tpu.pipeline_mode<synchronous>, transform_indices = @transform_1, window_bounds = array<i64: 32, 16>}, {pipeline_mode = #tpu.pipeline_mode<synchronous>, transform_indices = @transform_2, window_bounds = array<i64: 1, 16>}, {transform_indices = @transform_3, window_bounds = array<i64: 8, 16>}]} {
    %c0 = arith.constant 0 : index
    %c0_0 = arith.constant 0 : index
    %0 = vector.load %arg1[%c0, %c0_0] : memref<8x32xf32, #tpu.memory_space<vmem>>, vector<8x32xf32>
    %c0_1 = arith.constant 0 : index
    %c0_2 = arith.constant 0 : index
    %1 = vector.load %arg2[%c0_1, %c0_2] : memref<32x16xf32, #tpu.memory_space<vmem>>, vector<32x16xf32>
    %c0_3 = arith.constant 0 : index
    %c0_4 = arith.constant 0 : index
    %2 = vector.load %arg3[%c0_3, %c0_4] : memref<1x16xf32, #tpu.memory_space<vmem>>, vector<1x16xf32>
    %cst = arith.constant dense<0.000000e+00> : vector<8x16xf32>
    %3 = tpu.matmul %0, %1, %cst {dimension_numbers = #tpu.dot_dimension_numbers<[1], [0], [0], [1], [0, 0, 1, 1], [], []>, precision = #tpu.contract_precision<fp32>} : vector<8x32xf32>, vector<32x16xf32>, vector<8x16xf32> -> vector<8x16xf32>
    %4 = vector.broadcast %2 : vector<1x16xf32> to vector<8x16xf32>
    %5 = arith.addf %3, %4 : vector<8x16xf32>
    %6 = arith.mulf %5, %5 : vector<8x16xf32>
    %cst_5 = arith.constant dense<0.000000e+00> : vector<8xf32>
    %7 = vector.multi_reduction <add>, %6, %cst_5 [1] : vector<8x16xf32> to vector<8xf32>
    %8 = vector.shape_cast %7 : vector<8xf32> to vector<8x1xf32>
    %9 = math.sqrt %8 : vector<8x1xf32>
    %cst_6 = arith.constant 9.99999996E-13 : f32
    %10 = vector.broadcast %cst_6 : f32 to vector<8x1xf32>
    %11 = arith.maximumf %9, %10 : vector<8x1xf32>
    %12 = vector.broadcast %11 : vector<8x1xf32> to vector<8x16xf32>
    %13 = arith.divf %5, %12 : vector<8x16xf32>
    %c0_7 = arith.constant 0 : index
    %c0_8 = arith.constant 0 : index
    %14 = vector.load %arg4[%c0_7, %c0_8] : memref<8x16xf32, #tpu.memory_space<vmem>>, vector<8x16xf32>
    tpu.vector_store %arg4[%c0_7, %c0_8], %13 {strides = array<i32>} : memref<8x16xf32, #tpu.memory_space<vmem>>, vector<8x16xf32>,
    return
  }
  func.func @transform_0(%arg0: i32) -> (i32, i32) {
    %c0_i32 = arith.constant 0 : i32
    %c0_i32_0 = arith.constant 0 : i32
    return %arg0, %c0_i32 : i32, i32
  }
  func.func @transform_1(%arg0: i32) -> (i32, i32) {
    %c0_i32 = arith.constant 0 : i32
    %c0_i32_0 = arith.constant 0 : i32
    %c0_i32_1 = arith.constant 0 : i32
    return %c0_i32, %c0_i32_0 : i32, i32
  }
  func.func @transform_2(%arg0: i32) -> (i32, i32) {
    %c0_i32 = arith.constant 0 : i32
    %c0_i32_0 = arith.constant 0 : i32
    %c0_i32_1 = arith.constant 0 : i32
    return %c0_i32, %c0_i32_0 : i32, i32
  }
  func.func @transform_3(%arg0: i32) -> (i32, i32) {
    %c0_i32 = arith.constant 0 : i32
    %c0_i32_0 = arith.constant 0 : i32
    return %arg0, %c0_i32 : i32, i32
  }
}

</mosaic_0001>

<llo_original>
// kernel: tpu_custom_call.1
$region0: #{tpu_custom_call.1}
  #allocation0 [shape = 'u32[]', space=smem, size = 0x4, offset = 0x4, fixed_abs, tag = 'smem constant byte address 0x4 - core index']
  #allocation1 [shape = 'u32[144,128]{1,0:T(1,128)}', space=vmem, size = 0x12000, scoped, tag = 'internal scratch']
  %s0 = inlined_call_operand.vmem [shape: f32[8,32], index: 0, kind: input, shape index: {}]
  %s1 = inlined_call_operand.vmem [shape: f32[32,16], index: 1, kind: input, shape index: {}]
  %s2 = inlined_call_operand.vmem [shape: f32[1,16], index: 2, kind: input, shape index: {}]
  %s3 = inlined_call_operand.hbm [shape: f32[8,16], index: 3, kind: output, shape index: {}]
  %s4 = sld [smem:[#allocation0]]
  $region22: #{tpu_custom_call.1} parent=0
    _
  %s6 = ssub.s32 1, %s4
  %s7 = scalar_select 0, %s6, %s4
  $region1: #{tpu_custom_call.1} parent=0
    #allocation2 [shape = 'u8[4096]{0}', space=vmem, size = 0x1000, scoped, tag = 'output window, operand 0, single buffered']
    #allocation3 [shape = 's32[1]{0}', space=sflag, size = 0x4, scoped, tag = 'scoped memory for tpu_custom_call.1']
    %8 = vsyncpa [#allocation3], 0
    // Predicated region
    $region2: #{tpu_custom_call.1} parent=1 // pred_check
      _
    $region3: #{tpu_custom_call.1} parent=1 // pred_check_branch
      %10 = sbr.rel (0) target = $region5
    $region4: #{tpu_custom_call.1} parent=1 // pred_region
      _
    $region5: #{tpu_custom_call.1} parent=1 // pred_fallthru
      _
    // Predicated region
    $region6: #{tpu_custom_call.1} parent=1 // pred_check
      _
    $region7: #{tpu_custom_call.1} parent=1 // pred_check_branch
      %12 = sbr.rel (0) target = $region9
    $region8: #{tpu_custom_call.1} parent=1 // pred_region
      _
    $region9: #{tpu_custom_call.1} parent=1 // pred_fallthru
      _
    // Predicated region
    $region10: #{tpu_custom_call.1} parent=1 // pred_check
      _
    $region11: #{tpu_custom_call.1} parent=1 // pred_check_branch
      %14 = sbr.rel (0) target = $region13
    $region12: #{tpu_custom_call.1} parent=1 // pred_region
      _
    $region13: #{tpu_custom_call.1} parent=1 // pred_fallthru
      _
    %v15 = vld [vmem:[%s0] sm:$0xff]
    %v16 = vld [vmem:[%s1] sm:$0xff]
    %v17 = vld [vmem:[%s1 + $0x8] sm:$0xff]
    %v18 = vld [vmem:[%s1 + $0x10] sm:$0xff]
    %v19 = vld [vmem:[%s1 + $0x18] sm:$0xff]
    %v20 = vld [vmem:[%s2] sm:$0x1]
    %v22 = vlaneseq
    %v23 = vshrl.u32 %v22, 7
    %v24 = vsub.s32 0, %v23
    %v25 = vrot.slane %v20, %v24
    %vm27 = vcmask 261120
    %v29 = vsel %vm27, %v15, 0
    %31 = vmatprep.subr.mxu0 0.0
    %v32 = vand.u32 %v16, 4294901760
    %33 = vmatpush1.msra.mxu0 %v32
    %34 = vmatprep.subr.mxu0 0.0
    %v35 = vand.u32 %v17, 4294901760
    %36 = vmatpush1.msra.mxu0 %v35
    %37 = vmatprep.subr.mxu0 0.0
    %v38 = vand.u32 %v18, 4294901760
    %39 = vmatpush1.msra.mxu0 %v38
    %40 = vmatprep.subr.mxu0 0.0
    %v41 = vand.u32 %v19, 4294901760
    %42 = vmatpush1.msra.mxu0 %v41
    %43 = vmatprep.subr.mxu0 0.0
    %44 = vmatpush1.msra.mxu0 0.0
    %45 = vmatprep.subr.mxu0 0.0
    %46 = vmatpush1.msra.mxu0 0.0
    %47 = vmatprep.subr.mxu0 0.0
    %48 = vmatpush1.msra.mxu0 0.0
    %49 = vmatprep.subr.mxu0 0.0
    %50 = vmatpush1.msra.mxu0 0.0
    %51 = vmatprep.subr.mxu0 0.0
    %52 = vmatpush1.msra.mxu0 0.0
    %53 = vmatprep.subr.mxu0 0.0
    %54 = vmatpush1.msra.mxu0 0.0
    %55 = vmatprep.subr.mxu0 0.0
    %56 = vmatpush1.msra.mxu0 0.0
    %57 = vmatprep.subr.mxu0 0.0
    %58 = vmatpush1.msra.mxu0 0.0
    %59 = vmatprep.subr.mxu0 0.0
    %60 = vmatpush1.msra.mxu0 0.0
    %61 = vmatprep.subr.mxu0 0.0
    %62 = vmatpush1.msra.mxu0 0.0
    %63 = vmatprep.subr.mxu0 0.0
    %64 = vmatpush1.msra.mxu0 0.0
    %65 = vmatprep.subr.mxu0 0.0
    %66 = vmatpush1.msra.mxu0 0.0
    %67 = vmatprep.subr.mxu0 0.0
    %68 = vmatpush1.msra.mxu0 0.0
    %69 = vmatprep.subr.mxu0 0.0
    %70 = vmatpush1.msra.mxu0 0.0
    %71 = vmatprep.subr.mxu0 0.0
    %72 = vmatpush1.msra.mxu0 0.0
    %73 = vmatprep.subr.mxu0 0.0
    %74 = vmatpush1.msra.mxu0 0.0
    %75 = vmatprep.subr.mxu0 0.0
    %76 = vmatpush1.msra.mxu0 0.0
    %77 = vmatprep.subr.mxu0 0.0
    %78 = vmatpush1.msra.mxu0 0.0
    %79 = vmatprep.subr.mxu0 0.0
    %80 = vmatpush1.msra.mxu0 0.0
    %81 = vmatprep.subr.mxu0 0.0
    %82 = vmatpush1.msra.mxu0 0.0
    %83 = vmatprep.subr.mxu0 0.0
    %84 = vmatpush1.msra.mxu0 0.0
    %85 = vmatprep.subr.mxu0 0.0
    %86 = vmatpush1.msra.mxu0 0.0
    %87 = vmatprep.subr.mxu0 0.0
    %88 = vmatpush1.msra.mxu0 0.0
    %89 = vmatprep.subr.mxu0 0.0
    %90 = vmatpush1.msra.mxu0 0.0
    %91 = vmatprep.subr.mxu0 0.0
    %92 = vmatpush1.msra.mxu0 0.0
    %93 = vmatprep.subr.mxu0 0.0
    %94 = vmatpush1.msra.mxu0 0.0
    %95 = vmatprep.subr.mxu0 0.0
    %96 = vmatpush1.msra.mxu0 0.0
    %97 = vmatprep.subr.mxu0 0.0
    %98 = vmatpush1.msra.mxu0 0.0
    %99 = vmatprep.mubr.f32.mxu0 0.0
    %v100 = vand.u32 %v29, 4294901760
    %v101 = vsub.f32 %v29, %v100
    %v102 = vand.u32 %v101, 4294901760
    %v103 = vsub.f32 %v101, %v102
    %v104 = vand.u32 %v103, 4294901760
    %105 = vmatmul.mubr.f32.gmra.mrb[0].mxu0 %v104
    %v106 = vpop.f32.mrb[0].mxu0
    %v107 = vadd.f32 %v25, %v106
    %v108 = vpop.f32.mrb[0].mxu0
    %109 = vdwg.mxu0
    %110 = vmatprep.subr.mxu0 0.0
    %v111 = vand.u32 %v16, 4294901760
    %v112 = vsub.f32 %v16, %v111
    %v113 = vand.u32 %v112, 4294901760
    %v114 = vsub.f32 %v112, %v113
    %v115 = vand.u32 %v114, 4294901760
    %116 = vmatpush1.msra.mxu0 %v115
    %117 = vmatprep.subr.mxu0 0.0
    %v118 = vand.u32 %v17, 4294901760
    %v119 = vsub.f32 %v17, %v118
    %v120 = vand.u32 %v119, 4294901760
    %v121 = vsub.f32 %v119, %v120
    %v122 = vand.u32 %v121, 4294901760
    %123 = vmatpush1.msra.mxu0 %v122
    %124 = vmatprep.subr.mxu0 0.0
    %v125 = vand.u32 %v18, 4294901760
    %v126 = vsub.f32 %v18, %v125
    %v127 = vand.u32 %v126, 4294901760
    %v128 = vsub.f32 %v126, %v127
    %v129 = vand.u32 %v128, 4294901760
    %130 = vmatpush1.msra.mxu0 %v129
    %131 = vmatprep.subr.mxu0 0.0
    %v132 = vand.u32 %v19, 4294901760
    %v133 = vsub.f32 %v19, %v132
    %v134 = vand.u32 %v133, 4294901760
    %v135 = vsub.f32 %v133, %v134
    %v136 = vand.u32 %v135, 4294901760
    %137 = vmatpush1.msra.mxu0 %v136
    %138 = vmatprep.subr.mxu0 0.0
    %139 = vmatpush1.msra.mxu0 0.0
    %140 = vmatprep.subr.mxu0 0.0
    %141 = vmatpush1.msra.mxu0 0.0
    %142 = vmatprep.subr.mxu0 0.0
    %143 = vmatpush1.msra.mxu0 0.0
    %144 = vmatprep.subr.mxu0 0.0
    %145 = vmatpush1.msra.mxu0 0.0
    %146 = vmatprep.subr.mxu0 0.0
    %147 = vmatpush1.msra.mxu0 0.0
    %148 = vmatprep.subr.mxu0 0.0
    %149 = vmatpush1.msra.mxu0 0.0
    %150 = vmatprep.subr.mxu0 0.0
    %151 = vmatpush1.msra.mxu0 0.0
    %152 = vmatprep.subr.mxu0 0.0
    %153 = vmatpush1.msra.mxu0 0.0
    %154 = vmatprep.subr.mxu0 0.0
    %155 = vmatpush1.msra.mxu0 0.0
    %156 = vmatprep.subr.mxu0 0.0
    %157 = vmatpush1.msra.mxu0 0.0
    %158 = vmatprep.subr.mxu0 0.0
    %159 = vmatpush1.msra.mxu0 0.0
    %160 = vmatprep.subr.mxu0 0.0
    %161 = vmatpush1.msra.mxu0 0.0
    %162 = vmatprep.subr.mxu0 0.0
    %163 = vmatpush1.msra.mxu0 0.0
    %164 = vmatprep.subr.mxu0 0.0
    %165 = vmatpush1.msra.mxu0 0.0
    %166 = vmatprep.subr.mxu0 0.0
    %167 = vmatpush1.msra.mxu0 0.0
    %168 = vmatprep.subr.mxu0 0.0
    %169 = vmatpush1.msra.mxu0 0.0
    %170 = vmatprep.subr.mxu0 0.0
    %171 = vmatpush1.msra.mxu0 0.0
    %172 = vmatprep.subr.mxu0 0.0
    %173 = vmatpush1.msra.mxu0 0.0
    %174 = vmatprep.subr.mxu0 0.0
    %175 = vmatpush1.msra.mxu0 0.0
    %176 = vmatprep.subr.mxu0 0.0
    %177 = vmatpush1.msra.mxu0 0.0
    %178 = vmatprep.subr.mxu0 0.0
    %179 = vmatpush1.msra.mxu0 0.0
    %180 = vmatprep.subr.mxu0 0.0
    %181 = vmatpush1.msra.mxu0 0.0
    %182 = vmatprep.subr.mxu0 0.0
    %183 = vmatpush1.msra.mxu0 0.0
    %184 = vmatprep.subr.mxu0 0.0
    %185 = vmatpush1.msra.mxu0 0.0
    %186 = vmatprep.subr.mxu0 0.0
    %187 = vmatpush1.msra.mxu0 0.0
    %188 = vmatprep.subr.mxu0 0.0
    %189 = vmatpush1.msra.mxu0 0.0
    %190 = vmatprep.subr.mxu0 0.0
    %191 = vmatpush1.msra.mxu0 0.0
    %192 = vmatprep.subr.mxu0 0.0
    %193 = vmatpush1.msra.mxu0 0.0
    %194 = vmatprep.mubr.f32.mxu0 0.0
    %v195 = vand.u32 %v29, 4294901760
    %196 = vmatmul.mubr.f32.gmra.mrb[0].mxu0 %v195
    %v197 = vpop.f32.mrb[0].mxu0
    %v198 = vadd.f32 %v107, %v197
    %v199 = vpop.f32.mrb[0].mxu0
    %200 = vdwg.mxu0
    %201 = vmatprep.subr.mxu0 0.0
    %v202 = vand.u32 %v16, 4294901760
    %v203 = vsub.f32 %v16, %v202
    %204 = vmatpush1.msra.mxu0 %v203
    %205 = vmatprep.subr.mxu0 0.0
    %v206 = vand.u32 %v17, 4294901760
    %v207 = vsub.f32 %v17, %v206
    %208 = vmatpush1.msra.mxu0 %v207
    %209 = vmatprep.subr.mxu0 0.0
    %v210 = vand.u32 %v18, 4294901760
    %v211 = vsub.f32 %v18, %v210
    %212 = vmatpush1.msra.mxu0 %v211
    %213 = vmatprep.subr.mxu0 0.0
    %v214 = vand.u32 %v19, 4294901760
    %v215 = vsub.f32 %v19, %v214
    %216 = vmatpush1.msra.mxu0 %v215
    %217 = vmatprep.subr.mxu0 0.0
    %218 = vmatpush1.msra.mxu0 0.0
    %219 = vmatprep.subr.mxu0 0.0
    %220 = vmatpush1.msra.mxu0 0.0
    %221 = vmatprep.subr.mxu0 0.0
    %222 = vmatpush1.msra.mxu0 0.0
    %223 = vmatprep.subr.mxu0 0.0
    %224 = vmatpush1.msra.mxu0 0.0
    %225 = vmatprep.subr.mxu0 0.0
    %226 = vmatpush1.msra.mxu0 0.0
    %227 = vmatprep.subr.mxu0 0.0
    %228 = vmatpush1.msra.mxu0 0.0
    %229 = vmatprep.subr.mxu0 0.0
    %230 = vmatpush1.msra.mxu0 0.0
    %231 = vmatprep.subr.mxu0 0.0
    %232 = vmatpush1.msra.mxu0 0.0
    %233 = vmatprep.subr.mxu0 0.0
    %234 = vmatpush1.msra.mxu0 0.0
    %235 = vmatprep.subr.mxu0 0.0
    %236 = vmatpush1.msra.mxu0 0.0
    %237 = vmatprep.subr.mxu0 0.0
    %238 = vmatpush1.msra.mxu0 0.0
    %239 = vmatprep.subr.mxu0 0.0
    %240 = vmatpush1.msra.mxu0 0.0
    %241 = vmatprep.subr.mxu0 0.0
    %242 = vmatpush1.msra.mxu0 0.0
    %243 = vmatprep.subr.mxu0 0.0
    %244 = vmatpush1.msra.mxu0 0.0
    %245 = vmatprep.subr.mxu0 0.0
    %246 = vmatpush1.msra.mxu0 0.0
    %247 = vmatprep.subr.mxu0 0.0
    %248 = vmatpush1.msra.mxu0 0.0
    %249 = vmatprep.subr.mxu0 0.0
    %250 = vmatpush1.msra.mxu0 0.0
    %251 = vmatprep.subr.mxu0 0.0
    %252 = vmatpush1.msra.mxu0 0.0
    %253 = vmatprep.subr.mxu0 0.0
    %254 = vmatpush1.msra.mxu0 0.0
    %255 = vmatprep.subr.mxu0 0.0
    %256 = vmatpush1.msra.mxu0 0.0
    %257 = vmatprep.subr.mxu0 0.0
    %258 = vmatpush1.msra.mxu0 0.0
    %259 = vmatprep.subr.mxu0 0.0
    %260 = vmatpush1.msra.mxu0 0.0
    %261 = vmatprep.subr.mxu0 0.0
    %262 = vmatpush1.msra.mxu0 0.0
    %263 = vmatprep.subr.mxu0 0.0
    %264 = vmatpush1.msra.mxu0 0.0
    %265 = vmatprep.subr.mxu0 0.0
    %266 = vmatpush1.msra.mxu0 0.0
    %267 = vmatprep.subr.mxu0 0.0
    %268 = vmatpush1.msra.mxu0 0.0
    %269 = vmatprep.subr.mxu0 0.0
    %270 = vmatpush1.msra.mxu0 0.0
    %271 = vmatprep.subr.mxu0 0.0
    %272 = vmatpush1.msra.mxu0 0.0
    %273 = vmatprep.mubr.f32.mxu0 0.0
    %v274 = vand.u32 %v29, 4294901760
    %v275 = vsub.f32 %v29, %v274
    %276 = vmatmul.mubr.f32.gmra.mrb[0].mxu0 %v275
    %v277 = vpop.f32.mrb[0].mxu0
    %v278 = vadd.f32 %v198, %v277
    %v279 = vpop.f32.mrb[0].mxu0
    %280 = vdwg.mxu0
    %281 = vmatprep.subr.mxu0 0.0
    %v282 = vand.u32 %v16, 4294901760
    %283 = vmatpush1.msra.mxu0 %v282
    %284 = vmatprep.subr.mxu0 0.0
    %v285 = vand.u32 %v17, 4294901760
    %286 = vmatpush1.msra.mxu0 %v285
    %287 = vmatprep.subr.mxu0 0.0
    %v288 = vand.u32 %v18, 4294901760
    %289 = vmatpush1.msra.mxu0 %v288
    %290 = vmatprep.subr.mxu0 0.0
    %v291 = vand.u32 %v19, 4294901760
    %292 = vmatpush1.msra.mxu0 %v291
    %293 = vmatprep.subr.mxu0 0.0
    %294 = vmatpush1.msra.mxu0 0.0
    %295 = vmatprep.subr.mxu0 0.0
    %296 = vmatpush1.msra.mxu0 0.0
    %297 = vmatprep.subr.mxu0 0.0
    %298 = vmatpush1.msra.mxu0 0.0
    %299 = vmatprep.subr.mxu0 0.0
    %300 = vmatpush1.msra.mxu0 0.0
    %301 = vmatprep.subr.mxu0 0.0
    %302 = vmatpush1.msra.mxu0 0.0
    %303 = vmatprep.subr.mxu0 0.0
    %304 = vmatpush1.msra.mxu0 0.0
    %305 = vmatprep.subr.mxu0 0.0
    %306 = vmatpush1.msra.mxu0 0.0
    %307 = vmatprep.subr.mxu0 0.0
    %308 = vmatpush1.msra.mxu0 0.0
    %309 = vmatprep.subr.mxu0 0.0
    %310 = vmatpush1.msra.mxu0 0.0
    %311 = vmatprep.subr.mxu0 0.0
    %312 = vmatpush1.msra.mxu0 0.0
    %313 = vmatprep.subr.mxu0 0.0
    %314 = vmatpush1.msra.mxu0 0.0
    %315 = vmatprep.subr.mxu0 0.0
    %316 = vmatpush1.msra.mxu0 0.0
    %317 = vmatprep.subr.mxu0 0.0
    %318 = vmatpush1.msra.mxu0 0.0
    %319 = vmatprep.subr.mxu0 0.0
    %320 = vmatpush1.msra.mxu0 0.0
    %321 = vmatprep.subr.mxu0 0.0
    %322 = vmatpush1.msra.mxu0 0.0
    %323 = vmatprep.subr.mxu0 0.0
    %324 = vmatpush1.msra.mxu0 0.0
    %325 = vmatprep.subr.mxu0 0.0
    %326 = vmatpush1.msra.mxu0 0.0
    %327 = vmatprep.subr.mxu0 0.0
    %328 = vmatpush1.msra.mxu0 0.0
    %329 = vmatprep.subr.mxu0 0.0
    %330 = vmatpush1.msra.mxu0 0.0
    %331 = vmatprep.subr.mxu0 0.0
    %332 = vmatpush1.msra.mxu0 0.0
    %333 = vmatprep.subr.mxu0 0.0
    %334 = vmatpush1.msra.mxu0 0.0
    %335 = vmatprep.subr.mxu0 0.0
    %336 = vmatpush1.msra.mxu0 0.0
    %337 = vmatprep.subr.mxu0 0.0
    %338 = vmatpush1.msra.mxu0 0.0
    %339 = vmatprep.subr.mxu0 0.0
    %340 = vmatpush1.msra.mxu0 0.0
    %341 = vmatprep.subr.mxu0 0.0
    %342 = vmatpush1.msra.mxu0 0.0
    %343 = vmatprep.subr.mxu0 0.0
    %344 = vmatpush1.msra.mxu0 0.0
    %345 = vmatprep.subr.mxu0 0.0
    %346 = vmatpush1.msra.mxu0 0.0
    %347 = vmatprep.subr.mxu0 0.0
    %348 = vmatpush1.msra.mxu0 0.0
    %349 = vmatprep.mubr.f32.mxu0 0.0
    %v350 = vand.u32 %v29, 4294901760
    %v351 = vsub.f32 %v29, %v350
    %v352 = vand.u32 %v351, 4294901760
    %353 = vmatmul.mubr.f32.gmra.mrb[0].mxu0 %v352
    %v354 = vpop.f32.mrb[0].mxu0
    %v355 = vadd.f32 %v278, %v354
    %v356 = vpop.f32.mrb[0].mxu0
    %357 = vdwg.mxu0
    %358 = vmatprep.subr.mxu0 0.0
    %v359 = vand.u32 %v16, 4294901760
    %v360 = vsub.f32 %v16, %v359
    %v361 = vand.u32 %v360, 4294901760
    %362 = vmatpush1.msra.mxu0 %v361
    %363 = vmatprep.subr.mxu0 0.0
    %v364 = vand.u32 %v17, 4294901760
    %v365 = vsub.f32 %v17, %v364
    %v366 = vand.u32 %v365, 4294901760
    %367 = vmatpush1.msra.mxu0 %v366
    %368 = vmatprep.subr.mxu0 0.0
    %v369 = vand.u32 %v18, 4294901760
    %v370 = vsub.f32 %v18, %v369
    %v371 = vand.u32 %v370, 4294901760
    %372 = vmatpush1.msra.mxu0 %v371
    %373 = vmatprep.subr.mxu0 0.0
    %v374 = vand.u32 %v19, 4294901760
    %v375 = vsub.f32 %v19, %v374
    %v376 = vand.u32 %v375, 4294901760
    %377 = vmatpush1.msra.mxu0 %v376
    %378 = vmatprep.subr.mxu0 0.0
    %379 = vmatpush1.msra.mxu0 0.0
    %380 = vmatprep.subr.mxu0 0.0
    %381 = vmatpush1.msra.mxu0 0.0
    %382 = vmatprep.subr.mxu0 0.0
    %383 = vmatpush1.msra.mxu0 0.0
    %384 = vmatprep.subr.mxu0 0.0
    %385 = vmatpush1.msra.mxu0 0.0
    %386 = vmatprep.subr.mxu0 0.0
    %387 = vmatpush1.msra.mxu0 0.0
    %388 = vmatprep.subr.mxu0 0.0
    %389 = vmatpush1.msra.mxu0 0.0
    %390 = vmatprep.subr.mxu0 0.0
    %391 = vmatpush1.msra.mxu0 0.0
    %392 = vmatprep.subr.mxu0 0.0
    %393 = vmatpush1.msra.mxu0 0.0
    %394 = vmatprep.subr.mxu0 0.0
    %395 = vmatpush1.msra.mxu0 0.0
    %396 = vmatprep.subr.mxu0 0.0
    %397 = vmatpush1.msra.mxu0 0.0
    %398 = vmatprep.subr.mxu0 0.0
    %399 = vmatpush1.msra.mxu0 0.0
    %400 = vmatprep.subr.mxu0 0.0
    %401 = vmatpush1.msra.mxu0 0.0
    %402 = vmatprep.subr.mxu0 0.0
    %403 = vmatpush1.msra.mxu0 0.0
    %404 = vmatprep.subr.mxu0 0.0
    %405 = vmatpush1.msra.mxu0 0.0
    %406 = vmatprep.subr.mxu0 0.0
    %407 = vmatpush1.msra.mxu0 0.0
    %408 = vmatprep.subr.mxu0 0.0
    %409 = vmatpush1.msra.mxu0 0.0
    %410 = vmatprep.subr.mxu0 0.0
    %411 = vmatpush1.msra.mxu0 0.0
    %412 = vmatprep.subr.mxu0 0.0
    %413 = vmatpush1.msra.mxu0 0.0
    %414 = vmatprep.subr.mxu0 0.0
    %415 = vmatpush1.msra.mxu0 0.0
    %416 = vmatprep.subr.mxu0 0.0
    %417 = vmatpush1.msra.mxu0 0.0
    %418 = vmatprep.subr.mxu0 0.0
    %419 = vmatpush1.msra.mxu0 0.0
    %420 = vmatprep.subr.mxu0 0.0
    %421 = vmatpush1.msra.mxu0 0.0
    %422 = vmatprep.subr.mxu0 0.0
    %423 = vmatpush1.msra.mxu0 0.0
    %424 = vmatprep.subr.mxu0 0.0
    %425 = vmatpush1.msra.mxu0 0.0
    %426 = vmatprep.subr.mxu0 0.0
    %427 = vmatpush1.msra.mxu0 0.0
    %428 = vmatprep.subr.mxu0 0.0
    %429 = vmatpush1.msra.mxu0 0.0
    %430 = vmatprep.subr.mxu0 0.0
    %431 = vmatpush1.msra.mxu0 0.0
    %432 = vmatprep.subr.mxu0 0.0
    %433 = vmatpush1.msra.mxu0 0.0
    %434 = vmatprep.mubr.f32.mxu0 0.0
    %v435 = vand.u32 %v29, 4294901760
    %436 = vmatmul.mubr.f32.gmra.mrb[0].mxu0 %v435
    %v437 = vpop.f32.mrb[0].mxu0
    %v438 = vadd.f32 %v355, %v437
    %v439 = vpop.f32.mrb[0].mxu0
    %440 = vdwg.mxu0
    %441 = vmatprep.subr.mxu0 0.0
    %v442 = vand.u32 %v16, 4294901760
    %443 = vmatpush1.msra.mxu0 %v442
    %444 = vmatprep.subr.mxu0 0.0
    %v445 = vand.u32 %v17, 4294901760
    %446 = vmatpush1.msra.mxu0 %v445
    %447 = vmatprep.subr.mxu0 0.0
    %v448 = vand.u32 %v18, 4294901760
    %449 = vmatpush1.msra.mxu0 %v448
    %450 = vmatprep.subr.mxu0 0.0
    %v451 = vand.u32 %v19, 4294901760
    %452 = vmatpush1.msra.mxu0 %v451
    %453 = vmatprep.subr.mxu0 0.0
    %454 = vmatpush1.msra.mxu0 0.0
    %455 = vmatprep.subr.mxu0 0.0
    %456 = vmatpush1.msra.mxu0 0.0
    %457 = vmatprep.subr.mxu0 0.0
    %458 = vmatpush1.msra.mxu0 0.0
    %459 = vmatprep.subr.mxu0 0.0
    %460 = vmatpush1.msra.mxu0 0.0
    %461 = vmatprep.subr.mxu0 0.0
    %462 = vmatpush1.msra.mxu0 0.0
    %463 = vmatprep.subr.mxu0 0.0
    %464 = vmatpush1.msra.mxu0 0.0
    %465 = vmatprep.subr.mxu0 0.0
    %466 = vmatpush1.msra.mxu0 0.0
    %467 = vmatprep.subr.mxu0 0.0
    %468 = vmatpush1.msra.mxu0 0.0
    %469 = vmatprep.subr.mxu0 0.0
    %470 = vmatpush1.msra.mxu0 0.0
    %471 = vmatprep.subr.mxu0 0.0
    %472 = vmatpush1.msra.mxu0 0.0
    %473 = vmatprep.subr.mxu0 0.0
    %474 = vmatpush1.msra.mxu0 0.0
    %475 = vmatprep.subr.mxu0 0.0
    %476 = vmatpush1.msra.mxu0 0.0
    %477 = vmatprep.subr.mxu0 0.0
    %478 = vmatpush1.msra.mxu0 0.0
    %479 = vmatprep.subr.mxu0 0.0
    %480 = vmatpush1.msra.mxu0 0.0
    %481 = vmatprep.subr.mxu0 0.0
    %482 = vmatpush1.msra.mxu0 0.0
    %483 = vmatprep.subr.mxu0 0.0
    %484 = vmatpush1.msra.mxu0 0.0
    %485 = vmatprep.subr.mxu0 0.0
    %486 = vmatpush1.msra.mxu0 0.0
    %487 = vmatprep.subr.mxu0 0.0
    %488 = vmatpush1.msra.mxu0 0.0
    %489 = vmatprep.subr.mxu0 0.0
    %490 = vmatpush1.msra.mxu0 0.0
    %491 = vmatprep.subr.mxu0 0.0
    %492 = vmatpush1.msra.mxu0 0.0
    %493 = vmatprep.subr.mxu0 0.0
    %494 = vmatpush1.msra.mxu0 0.0
    %495 = vmatprep.subr.mxu0 0.0
    %496 = vmatpush1.msra.mxu0 0.0
    %497 = vmatprep.subr.mxu0 0.0
    %498 = vmatpush1.msra.mxu0 0.0
    %499 = vmatprep.subr.mxu0 0.0
    %500 = vmatpush1.msra.mxu0 0.0
    %501 = vmatprep.subr.mxu0 0.0
    %502 = vmatpush1.msra.mxu0 0.0
    %503 = vmatprep.subr.mxu0 0.0
    %504 = vmatpush1.msra.mxu0 0.0
    %505 = vmatprep.subr.mxu0 0.0
    %506 = vmatpush1.msra.mxu0 0.0
    %507 = vmatprep.subr.mxu0 0.0
    %508 = vmatpush1.msra.mxu0 0.0
    %509 = vmatprep.mubr.f32.mxu0 0.0
    %v510 = vand.u32 %v29, 4294901760
    %511 = vmatmul.mubr.f32.gmra.mrb[0].mxu0 %v510
    %v512 = vpop.f32.mrb[0].mxu0
    %v513 = vadd.f32 %v438, %v512
    %v514 = vpop.f32.mrb[0].mxu0
    %515 = vdwg.mxu0
    %v516 = vmul.f32 %v513, %v513
    %vm517 = vcmask 130048
    %v518 = vsel %vm517, %v516, 0.0
    %519 = vadd.xlane.f32.xlu0 %v518
    %v520 = vpop.xlane.xlu0 %519
    %v521 = vrsqrt.pop %v520
    %v522 = vmul.f32 %v520, %v521
    %vm523 = vcmp.eq.f32.partialorder %v520, inf
    %v524 = vsel %vm523, %v520, %v522
    %vm525 = vcmp.eq.f32.partialorder %v520, 0.0
    %v526 = vand.u32 %v520, 2147483648
    %v527 = vsel %vm525, %v526, %v524
    %v528 = vmax.f32 %v527, 1e-12
    %v529 = vrcp.pop %v528
    %v530 = vmul.f32 %v513, %v529
    %531 = vst.msk [vmem:[#allocation2] sm:$0xff] %vm517, %v530
    // Predicated region
    $region14: #{tpu_custom_call.1} parent=1 // pred_check
      _
    $region15: #{tpu_custom_call.1} parent=1 // pred_check_branch
      %533 = sbr.rel (0) target = $region17
    $region16: #{tpu_custom_call.1} parent=1 // pred_region
      %s535 = ssub.s32 128, 128
      %536 = vsyncadd [#allocation3], %s535
      %s538 = sshll.u32 [#allocation2], 4
      %s539 = int_to_ptr.vmem [resolvable:$true] %s538
      %541 = dma.vmem_to_hbm [thread:$0]  %s539, 128, %s3, [#allocation3]
    $region17: #{tpu_custom_call.1} parent=1 // pred_fallthru
      _
    // Predicated region
    $region18: #{tpu_custom_call.1} parent=1 // pred_check
      _
    $region19: #{tpu_custom_call.1} parent=1 // pred_check_branch
      %543 = sbr.rel (0) target = $region21
    $region20: #{tpu_custom_call.1} parent=1 // pred_region
      %544 = dma.done [#allocation3], 128
    $region21: #{tpu_custom_call.1} parent=1 // pred_fallthru
      _
    %545 = vsyncpa [#allocation3], 1

</llo_original>
